<compile_context>
chip_gen: v5e
topology: v5e:2x2
jax: 0.10.0
libtpu: 0.0.40
codegen_flags: <defaults>
</compile_context>

<pallas_src>
import math

import jax
import jax.numpy as jnp
from jax.experimental import pallas as pl
from jax.experimental.pallas import tpu as pltpu

_SUBLANE = 8  # f32 sublane count (second-to-last dim) of a vreg


def _round_up(x, m):
    return ((x + m - 1) // m) * m


def _policy_kernel(x_ref, w1_ref, b1_ref, w2_ref, b2_ref, o_ref):
    # x.to(float32)
    x = x_ref[...].astype(jnp.float32)

    # Linear 1: (TB, S) @ (S, H) + (1, H), then ReLU (VPU).
    h = jnp.dot(x, w1_ref[...], preferred_element_type=jnp.float32) + b1_ref[...]
    h = jnp.maximum(h, 0.0)

    # Linear 2: (TB, H) @ (H, A) + (1, A).  Output block is exactly A lanes
    # wide (masked vst), which minimizes HBM writeback bytes.
    out = jnp.dot(h, w2_ref[...], preferred_element_type=jnp.float32) + b2_ref[...]
    o_ref[...] = out.astype(o_ref.dtype)


def policy_forward(x, w1, b1, w2, b2, *, block_batch=4096):
    """Run the Policy MLP forward pass as a single Pallas TPU kernel.

    Args:
      x:  (batch, state_size)      -- any float-castable dtype
      w1: (state_size, hidden)     -- float-castable
      b1: (hidden,)
      w2: (hidden, action_size)
      b2: (action_size,)
      block_batch: max rows per grid step (rounded to a multiple of 8)

    Returns:
      (batch, action_size) float32 logits.
    """
    batch, state_size = x.shape
    hidden = w1.shape[1]
    action_size = w2.shape[1]

    # Parameter prep is negligible (tiny tensors) and folds away under jit.
    w1 = w1.astype(jnp.float32)
    w2 = w2.astype(jnp.float32)
    b1_2d = b1.reshape(1, hidden).astype(jnp.float32)
    b2_2d = b2.reshape(1, action_size).astype(jnp.float32)

    # Batch tile: multiple of 8 (f32 sublane), capped at block_batch.  For a
    # batch smaller than one sublane, use the full batch (block dim equal to
    # the full array dim is always legal).
    if batch < _SUBLANE:
        tb = batch
    else:
        tb = min(_round_up(block_batch, _SUBLANE), _round_up(batch, _SUBLANE))

    grid = (pl.cdiv(batch, tb),)

    # Advisory cost hint for XLA's scheduler around the custom call.
    cost = pl.CostEstimate(
        flops=2 * batch * (state_size * hidden + hidden * action_size),
        transcendentals=0,
        bytes_accessed=(
            batch * (x.dtype.itemsize * state_size + 4 * action_size)
            + 4 * (state_size * hidden + hidden + hidden * action_size + action_size)
        ),
    )

    return pl.pallas_call(
        _policy_kernel,
        out_shape=jax.ShapeDtypeStruct((batch, action_size), jnp.float32),
        grid_spec=pltpu.PrefetchScalarGridSpec(
            num_scalar_prefetch=0,
            grid=grid,
            in_specs=[
                # Only x is tiled over the batch grid (auto double-buffered).
                pl.BlockSpec((tb, state_size), lambda i: (i, 0)),
                # Tiny weights/biases: constant index_map -> stay VMEM-resident.
                pl.BlockSpec((state_size, hidden), lambda i: (0, 0)),
                pl.BlockSpec((1, hidden), lambda i: (0, 0)),
                pl.BlockSpec((hidden, action_size), lambda i: (0, 0)),
                pl.BlockSpec((1, action_size), lambda i: (0, 0)),
            ],
            out_specs=pl.BlockSpec((tb, action_size), lambda i: (i, 0)),
        ),
        compiler_params=pltpu.CompilerParams(
            # Batch tiles are independent -> shard across TCs on v7x megacore.
            dimension_semantics=("parallel",),
        ),
        cost_estimate=cost,
    )(x, w1, b1_2d, w2, b2_2d)


def init_policy_params(key, state_size, action_size, hidden_size_1):
    """Deterministic init mirroring nn.Linear's default U(-1/sqrt(fan_in), +)."""
    k1, k2, k3, k4 = jax.random.split(key, 4)

    bound1 = 1.0 / math.sqrt(state_size)
    w1 = jax.random.uniform(k1, (state_size, hidden_size_1), jnp.float32,
                            minval=-bound1, maxval=bound1)
    b1 = jax.random.uniform(k2, (hidden_size_1,), jnp.float32,
                            minval=-bound1, maxval=bound1)

    bound2 = 1.0 / math.sqrt(hidden_size_1)
    w2 = jax.random.uniform(k3, (hidden_size_1, action_size), jnp.float32,
                            minval=-bound2, maxval=bound2)
    b2 = jax.random.uniform(k4, (action_size,), jnp.float32,
                            minval=-bound2, maxval=bound2)

    return w1, b1, w2, b2


if __name__ == "__main__":
    # Small shapes consistent with the module's constructor signature.
    batch = 2
    state_size = 16
    hidden_size_1 = 32
    action_size = 8

    key = jax.random.PRNGKey(0)
    key_x, key_p = jax.random.split(key)

    x = jax.random.normal(key_x, (batch, state_size), dtype=jnp.float32)
    w1, b1, w2, b2 = init_policy_params(key_p, state_size, action_size, hidden_size_1)

    out = jax.block_until_ready(policy_forward(x, w1, b1, w2, b2))

    # Pure-JAX reference check of the same math (f32 end to end).
    ref = jnp.maximum(x.astype(jnp.float32) @ w1 + b1, 0.0) @ w2 + b2
    assert out.shape == (batch, action_size)
    assert jnp.allclose(out, ref, atol=1e-5, rtol=1e-5)

    # Exercise the multi-step grid + non-divisible tail-block (masked) path.
    big_batch = 1024 + 3  # not a multiple of the tile
    xb = jax.random.normal(key_x, (big_batch, state_size), dtype=jnp.float32)
    out_b = jax.block_until_ready(
        policy_forward(xb, w1, b1, w2, b2, block_batch=512))
    ref_b = jnp.maximum(xb @ w1 + b1, 0.0) @ w2 + b2
    assert out_b.shape == (big_batch, action_size)
    assert jnp.allclose(out_b, ref_b, atol=1e-5, rtol=1e-5)

    print("KERNEL_OK")
</pallas_src>

<mosaic_0001>
module attributes {stable_mosaic.version = 11 : i64} {
  func.func @_policy_kernel(%arg0: i32, %arg1: memref<2x16xf32, #tpu.memory_space<vmem>>, %arg2: memref<16x32xf32, #tpu.memory_space<vmem>>, %arg3: memref<1x32xf32, #tpu.memory_space<vmem>>, %arg4: memref<32x8xf32, #tpu.memory_space<vmem>>, %arg5: memref<1x8xf32, #tpu.memory_space<vmem>>, %arg6: memref<2x8xf32, #tpu.memory_space<vmem>>) attributes {dimension_semantics = [#tpu.dimension_semantics<parallel>], iteration_bounds = array<i64: 1>, scalar_prefetch = 0 : i64, scratch_operands = 0 : i64, tpu.core_type = #tpu.core_type<tc>, window_params = [{transform_indices = @transform_0, window_bounds = array<i64: 2, 16>}, {pipeline_mode = #tpu.pipeline_mode<synchronous>, transform_indices = @transform_1, window_bounds = array<i64: 16, 32>}, {pipeline_mode = #tpu.pipeline_mode<synchronous>, transform_indices = @transform_2, window_bounds = array<i64: 1, 32>}, {pipeline_mode = #tpu.pipeline_mode<synchronous>, transform_indices = @transform_3, window_bounds = array<i64: 32, 8>}, {pipeline_mode = #tpu.pipeline_mode<synchronous>, transform_indices = @transform_4, window_bounds = array<i64: 1, 8>}, {transform_indices = @transform_5, window_bounds = array<i64: 2, 8>}]} {
    %c0 = arith.constant 0 : index
    %c0_0 = arith.constant 0 : index
    %0 = vector.load %arg1[%c0, %c0_0] : memref<2x16xf32, #tpu.memory_space<vmem>>, vector<2x16xf32>
    %c0_1 = arith.constant 0 : index
    %c0_2 = arith.constant 0 : index
    %1 = vector.load %arg2[%c0_1, %c0_2] : memref<16x32xf32, #tpu.memory_space<vmem>>, vector<16x32xf32>
    %cst = arith.constant dense<0.000000e+00> : vector<2x32xf32>
    %2 = tpu.matmul %0, %1, %cst {dimension_numbers = #tpu.dot_dimension_numbers<[1], [0], [0], [1], [0, 0, 1, 1], [], []>} : vector<2x16xf32>, vector<16x32xf32>, vector<2x32xf32> -> vector<2x32xf32>
    %c0_3 = arith.constant 0 : index
    %c0_4 = arith.constant 0 : index
    %3 = vector.load %arg3[%c0_3, %c0_4] : memref<1x32xf32, #tpu.memory_space<vmem>>, vector<1x32xf32>
    %4 = vector.broadcast %3 : vector<1x32xf32> to vector<2x32xf32>
    %5 = arith.addf %2, %4 : vector<2x32xf32>
    %cst_5 = arith.constant 0.000000e+00 : f32
    %6 = vector.broadcast %cst_5 : f32 to vector<2x32xf32>
    %7 = arith.maximumf %5, %6 : vector<2x32xf32>
    %c0_6 = arith.constant 0 : index
    %c0_7 = arith.constant 0 : index
    %8 = vector.load %arg4[%c0_6, %c0_7] : memref<32x8xf32, #tpu.memory_space<vmem>>, vector<32x8xf32>
    %cst_8 = arith.constant dense<0.000000e+00> : vector<2x8xf32>
    %9 = tpu.matmul %7, %8, %cst_8 {dimension_numbers = #tpu.dot_dimension_numbers<[1], [0], [0], [1], [0, 0, 1, 1], [], []>} : vector<2x32xf32>, vector<32x8xf32>, vector<2x8xf32> -> vector<2x8xf32>
    %c0_9 = arith.constant 0 : index
    %c0_10 = arith.constant 0 : index
    %10 = vector.load %arg5[%c0_9, %c0_10] : memref<1x8xf32, #tpu.memory_space<vmem>>, vector<1x8xf32>
    %11 = vector.broadcast %10 : vector<1x8xf32> to vector<2x8xf32>
    %12 = arith.addf %9, %11 : vector<2x8xf32>
    %c0_11 = arith.constant 0 : index
    %c0_12 = arith.constant 0 : index
    %13 = vector.load %arg6[%c0_11, %c0_12] : memref<2x8xf32, #tpu.memory_space<vmem>>, vector<2x8xf32>
    tpu.vector_store %arg6[%c0_11, %c0_12], %12 {strides = array<i32>} : memref<2x8xf32, #tpu.memory_space<vmem>>, vector<2x8xf32>,
    return
  }
  func.func @transform_0(%arg0: i32) -> (i32, i32) {
    %c0_i32 = arith.constant 0 : i32
    %c0_i32_0 = arith.constant 0 : i32
    return %arg0, %c0_i32 : i32, i32
  }
  func.func @transform_1(%arg0: i32) -> (i32, i32) {
    %c0_i32 = arith.constant 0 : i32
    %c0_i32_0 = arith.constant 0 : i32
    %c0_i32_1 = arith.constant 0 : i32
    return %c0_i32, %c0_i32_0 : i32, i32
  }
  func.func @transform_2(%arg0: i32) -> (i32, i32) {
    %c0_i32 = arith.constant 0 : i32
    %c0_i32_0 = arith.constant 0 : i32
    %c0_i32_1 = arith.constant 0 : i32
    return %c0_i32, %c0_i32_0 : i32, i32
  }
  func.func @transform_3(%arg0: i32) -> (i32, i32) {
    %c0_i32 = arith.constant 0 : i32
    %c0_i32_0 = arith.constant 0 : i32
    %c0_i32_1 = arith.constant 0 : i32
    return %c0_i32, %c0_i32_0 : i32, i32
  }
  func.func @transform_4(%arg0: i32) -> (i32, i32) {
    %c0_i32 = arith.constant 0 : i32
    %c0_i32_0 = arith.constant 0 : i32
    %c0_i32_1 = arith.constant 0 : i32
    return %c0_i32, %c0_i32_0 : i32, i32
  }
  func.func @transform_5(%arg0: i32) -> (i32, i32) {
    %c0_i32 = arith.constant 0 : i32
    %c0_i32_0 = arith.constant 0 : i32
    return %arg0, %c0_i32 : i32, i32
  }
}

</mosaic_0001>

<llo_original>
// kernel: tpu_custom_call.1
$region0: #{tpu_custom_call.1}
  #allocation0 [shape = 'u32[]', space=smem, size = 0x4, offset = 0x4, fixed_abs, tag = 'smem constant byte address 0x4 - core index']
  #allocation1 [shape = 'u32[72,128]{1,0:T(1,128)}', space=vmem, size = 0x9000, scoped, tag = 'internal scratch']
  %s0 = inlined_call_operand.vmem [shape: f32[2,16], index: 0, kind: input, shape index: {}]
  %s1 = inlined_call_operand.vmem [shape: f32[16,32], index: 1, kind: input, shape index: {}]
  %s2 = inlined_call_operand.vmem [shape: f32[1,32], index: 2, kind: input, shape index: {}]
  %s3 = inlined_call_operand.vmem [shape: f32[32,8], index: 3, kind: input, shape index: {}]
  %s4 = inlined_call_operand.vmem [shape: f32[1,8], index: 4, kind: input, shape index: {}]
  %s5 = inlined_call_operand.hbm [shape: f32[2,8], index: 5, kind: output, shape index: {}]
  %s6 = sld [smem:[#allocation0]]
  $region30: #{tpu_custom_call.1} parent=0
    _
  %s8 = ssub.s32 1, %s6
  %s9 = scalar_select 0, %s8, %s6
  $region1: #{tpu_custom_call.1} parent=0
    #allocation2 [shape = 'u8[1024]{0}', space=vmem, size = 0x400, scoped, tag = 'output window, operand 0, single buffered']
    #allocation3 [shape = 's32[1]{0}', space=sflag, size = 0x4, scoped, tag = 'scoped memory for tpu_custom_call.1']
    %10 = vsyncpa [#allocation3], 0
    // Predicated region
    $region2: #{tpu_custom_call.1} parent=1 // pred_check
      _
    $region3: #{tpu_custom_call.1} parent=1 // pred_check_branch
      %12 = sbr.rel (0) target = $region5
    $region4: #{tpu_custom_call.1} parent=1 // pred_region
      _
    $region5: #{tpu_custom_call.1} parent=1 // pred_fallthru
      _
    // Predicated region
    $region6: #{tpu_custom_call.1} parent=1 // pred_check
      _
    $region7: #{tpu_custom_call.1} parent=1 // pred_check_branch
      %14 = sbr.rel (0) target = $region9
    $region8: #{tpu_custom_call.1} parent=1 // pred_region
      _
    $region9: #{tpu_custom_call.1} parent=1 // pred_fallthru
      _
    // Predicated region
    $region10: #{tpu_custom_call.1} parent=1 // pred_check
      _
    $region11: #{tpu_custom_call.1} parent=1 // pred_check_branch
      %16 = sbr.rel (0) target = $region13
    $region12: #{tpu_custom_call.1} parent=1 // pred_region
      _
    $region13: #{tpu_custom_call.1} parent=1 // pred_fallthru
      _
    // Predicated region
    $region14: #{tpu_custom_call.1} parent=1 // pred_check
      _
    $region15: #{tpu_custom_call.1} parent=1 // pred_check_branch
      %18 = sbr.rel (0) target = $region17
    $region16: #{tpu_custom_call.1} parent=1 // pred_region
      _
    $region17: #{tpu_custom_call.1} parent=1 // pred_fallthru
      _
    // Predicated region
    $region18: #{tpu_custom_call.1} parent=1 // pred_check
      _
    $region19: #{tpu_custom_call.1} parent=1 // pred_check_branch
      %20 = sbr.rel (0) target = $region21
    $region20: #{tpu_custom_call.1} parent=1 // pred_region
      _
    $region21: #{tpu_custom_call.1} parent=1 // pred_fallthru
      _
    %v21 = vld [vmem:[%s0] sm:$0x3]
    %v22 = vld [vmem:[%s1] sm:$0xff]
    %v23 = vld [vmem:[%s1 + $0x8] sm:$0xff]
    %v24 = vld [vmem:[%s2] sm:$0x1]
    %v26 = vperm.slane %v24, 0
    %vm28 = vcmask 130048
    %v30 = vsel %vm28, %v21, 0
    %32 = vmatpush.msra.mxu0 0.0
    %33 = vmatpush.msra.mxu0 0.0
    %34 = vmatpush.msra.mxu0 0.0
    %35 = vmatpush.msra.mxu0 0.0
    %36 = vmatpush.msra.mxu0 0.0
    %37 = vmatpush.msra.mxu0 0.0
    %38 = vmatpush.msra.mxu0 0.0
    %39 = vmatpush.msra.mxu0 0.0
    %40 = vmatpush.msra.mxu0 0.0
    %41 = vmatpush.msra.mxu0 0.0
    %42 = vmatpush.msra.mxu0 0.0
    %43 = vmatpush.msra.mxu0 0.0
    %44 = vmatpush.msra.mxu0 0.0
    %45 = vmatpush.msra.mxu0 0.0
    %46 = vmatpush.msra.mxu0 %v23
    %47 = vmatpush.msra.mxu0 %v22
    %48 = vmatmul.f32.gmra.mxu0 %v30
    %v49 = vpop.f32.mrf.mxu0
    %v50 = vadd.f32 %v26, %v49
    %51 = vdwg.mxu0
    %v52 = vmax.f32 %v50, 0.0
    %v53 = vld [vmem:[%s3] sm:$0xff]
    %v54 = vld [vmem:[%s3 + $0x8] sm:$0xff]
    %v55 = vld [vmem:[%s3 + $0x10] sm:$0xff]
    %v56 = vld [vmem:[%s3 + $0x18] sm:$0xff]
    %v57 = vld [vmem:[%s4] sm:$0x1]
    %v59 = vperm.slane %v57, 0
    %vm61 = vcmask 261120
    %v63 = vsel %vm61, %v52, 0
    %65 = vmatpush.msra.mxu0 0.0
    %66 = vmatpush.msra.mxu0 0.0
    %67 = vmatpush.msra.mxu0 0.0
    %68 = vmatpush.msra.mxu0 0.0
    %69 = vmatpush.msra.mxu0 0.0
    %70 = vmatpush.msra.mxu0 0.0
    %71 = vmatpush.msra.mxu0 0.0
    %72 = vmatpush.msra.mxu0 0.0
    %73 = vmatpush.msra.mxu0 0.0
    %74 = vmatpush.msra.mxu0 0.0
    %75 = vmatpush.msra.mxu0 0.0
    %76 = vmatpush.msra.mxu0 0.0
    %77 = vmatpush.msra.mxu0 %v56
    %78 = vmatpush.msra.mxu0 %v55
    %79 = vmatpush.msra.mxu0 %v54
    %80 = vmatpush.msra.mxu0 %v53
    %81 = vmatmul.f32.gmra.mxu0 %v63
    %v82 = vpop.f32.mrf.mxu0
    %v83 = vadd.f32 %v59, %v82
    %84 = vdwg.mxu0
    %vm85 = vcmask 58368
    %86 = vst.msk [vmem:[#allocation2] sm:$0x3] %vm85, %v83
    // Predicated region
    $region22: #{tpu_custom_call.1} parent=1 // pred_check
      _
    $region23: #{tpu_custom_call.1} parent=1 // pred_check_branch
      %88 = sbr.rel (0) target = $region25
    $region24: #{tpu_custom_call.1} parent=1 // pred_region
      %90 = vsyncadd [#allocation3], 0
      %s92 = sshll.u32 [#allocation2], 4
      %s93 = int_to_ptr.vmem [resolvable:$true] %s92
      %s94 = sshll.u32 %s5, 4
      %s95 = int_to_ptr.hbm [resolvable:$true] %s94
      %97 = dma.vmem_to_hbm [thread:$0]  %s93, 32, %s95, [#allocation3]
    $region25: #{tpu_custom_call.1} parent=1 // pred_fallthru
      _
    // Predicated region
    $region26: #{tpu_custom_call.1} parent=1 // pred_check
      _
    $region27: #{tpu_custom_call.1} parent=1 // pred_check_branch
      %99 = sbr.rel (0) target = $region29
    $region28: #{tpu_custom_call.1} parent=1 // pred_region
      %101 = dma.done [#allocation3], 32
    $region29: #{tpu_custom_call.1} parent=1 // pred_fallthru
      _
    %102 = vsyncpa [#allocation3], 1

</llo_original>
